<compile_context>
chip_gen: v7x
topology: tpu7x:2x2x1
jax: 0.10.0
libtpu: 0.0.40
codegen_flags: <defaults>
</compile_context>

<pallas_src>
import math
from functools import partial

import jax
import jax.numpy as jnp
from jax import lax
from jax.experimental import pallas as pl
from jax.experimental.pallas import tpu as pltpu


def _resblock_kernel(x_ref, w1_ref, b1_ref, w2_ref, b2_ref, mask_ref, o_ref, *, S):
    """One batch element per grid step.

    x_ref    : (1, Cp, Lp)      zero-padded input, channels first, spatial flattened
                                with row stride S (2 left / >=1 right zero cols,
                                2 top / 3 bottom zero rows), Cp = channels padded to 8.
    w1_ref   : (Cmp, 9*Cp)      conv1 weights, column order (dy, dx, ci).
    b1_ref   : (Cmp, 1)
    w2_ref   : (Cout, 9*Cmp)    conv2 weights, column order (dy, dx, cm).
    b2_ref   : (Cout, 1)
    mask_ref : (1, M1) f32      1.0 where a conv1 halo-grid entry is a real pixel.
    o_ref    : (1, Cout, M2)    output on the same stride-S grid (cols [W, S) unused).
    """
    M1 = mask_ref.shape[1]
    M2 = o_ref.shape[2]
    Cout = o_ref.shape[1]

    xin = x_ref[0]                                    # (Cp, Lp) f32
    mask = mask_ref[...]                              # (1, M1)
    offs = [dy * S + dx for dy in range(3) for dx in range(3)]

    # ---- conv1: im2col -> single MXU matmul (K = 9*Cp), evaluated on a 1-px halo ring
    p1 = jnp.concatenate([xin[:, o:o + M1] for o in offs], axis=0)       # (9*Cp, M1)
    y1 = jnp.dot(w1_ref[...], p1.astype(w1_ref.dtype),
                 preferred_element_type=jnp.float32) + b1_ref[...]       # (Cmp, M1)
    # LeakyReLU(0.2), then zero the halo ring / pad columns -> acts as conv2's zero pad.
    y1 = jnp.where(y1 > 0, y1, 0.2 * y1) * mask

    # ---- conv2: im2col -> single MXU matmul (K = 9*Cmp) ---------------------------
    p2 = jnp.concatenate([y1[:, o:o + M2] for o in offs], axis=0)        # (9*Cmp, M2)
    y2 = jnp.dot(w2_ref[...], p2.astype(w2_ref.dtype),
                 preferred_element_type=jnp.float32) + b2_ref[...]       # (Cout, M2)

    # ---- residual add + lane-dense store -----------------------------------------
    res = xin[:Cout, 2 * S + 2: 2 * S + 2 + M2]                          # x on the same grid
    o_ref[0] = (y2 + res).astype(o_ref.dtype)


def resblock_sr(x_nchw, w1, b1, w2, b2, *, matmul_dtype=jnp.float32):
    """Pallas implementation of _ResBlockSR.forward.  x_nchw: (N, Cin, H, W), weights HWIO."""
    N, C, H, W = x_nchw.shape
    Cmid = w1.shape[3]
    Cout = w2.shape[3]
    if w1.shape[:3] != (3, 3, C) or w2.shape[:3] != (3, 3, Cmid):
        raise ValueError("expected 3x3 HWIO conv weights matching the input channels")
    if Cout != C:
        raise ValueError("residual add requires inchannel == outchannel")

    SUB = 8
    Cp = ((C + SUB - 1) // SUB) * SUB          # conv1 input channels padded to sublane tile
    Cmp = ((Cmid + SUB - 1) // SUB) * SUB      # conv1 output / conv2 input channels padded

    # Flattened row stride S: 2 left zeros + W pixels + >=1 right zero.  Round S up a
    # little so the stored (flattened) output width H*S is a multiple of 128 (fully
    # unmasked vst); fall back to the minimal stride if that would cost too much.
    S = W + 3
    g = 128 // math.gcd(H, 128)
    S_round = ((S + g - 1) // g) * g
    if S_round <= W + 3 + 32:
        S = S_round

    Rp = H + 5                                  # 2 top + H + 3 bottom zero rows
    Lp = Rp * S                                 # flattened padded spatial length
    M1 = (H + 2) * S + 2                        # conv1 halo grid length (+2 slack)
    M2 = H * S                                  # conv2 / output grid length

    x = x_nchw.astype(jnp.float32)
    # Fold channel + spatial zero padding into one padded copy; flatten spatial.
    xpad = jnp.pad(x, ((0, 0), (0, Cp - C), (2, 3), (2, S - W - 2)))
    xflat = xpad.reshape(N, Cp, Lp)

    # Weights HWIO (3,3,ci,co) -> (co, 9*ci_padded); column order (dy, dx, ci).
    w1p = jnp.pad(w1, ((0, 0), (0, 0), (0, Cp - C), (0, Cmp - Cmid)))
    w1t = w1p.reshape(9 * Cp, Cmp).T.astype(matmul_dtype)
    b1c = jnp.pad(b1, (0, Cmp - Cmid)).reshape(Cmp, 1).astype(jnp.float32)
    w2p = jnp.pad(w2, ((0, 0), (0, 0), (0, Cmp - Cmid), (0, 0)))
    w2t = w2p.reshape(9 * Cmp, Cout).T.astype(matmul_dtype)
    b2c = b2.reshape(Cout, 1).astype(jnp.float32)

    # Static validity mask over the conv1 halo grid: entry t maps to pixel
    # (row = t//S - 1, col = t%S - 1); 1.0 only for real image pixels.
    t = jnp.arange(M1)
    col, row = t % S, t // S
    mask = (((col >= 1) & (col <= W) & (row >= 1) & (row <= H))
            .astype(jnp.float32).reshape(1, M1))

    kernel = partial(_resblock_kernel, S=S)

    out_flat = pl.pallas_call(
        kernel,
        out_shape=jax.ShapeDtypeStruct((N, Cout, M2), jnp.float32),
        grid=(N,),
        in_specs=[
            pl.BlockSpec((1, Cp, Lp), lambda n: (n, 0, 0)),
            pl.BlockSpec((Cmp, 9 * Cp), lambda n: (0, 0)),
            pl.BlockSpec((Cmp, 1), lambda n: (0, 0)),
            pl.BlockSpec((Cout, 9 * Cmp), lambda n: (0, 0)),
            pl.BlockSpec((Cout, 1), lambda n: (0, 0)),
            pl.BlockSpec((1, M1), lambda n: (0, 0)),
        ],
        out_specs=pl.BlockSpec((1, Cout, M2), lambda n: (n, 0, 0)),
        compiler_params=pltpu.CompilerParams(
            dimension_semantics=("parallel",),
            vmem_limit_bytes=32 * 1024 * 1024),
    )(xflat, w1t, b1c, w2t, b2c, mask)

    # Strip the unused stride-padding columns; output is already NCHW (no transpose).
    out = out_flat.reshape(N, Cout, H, S)[:, :, :, :W]
    return out.astype(x_nchw.dtype)


def _reference(x_nchw, w1, b1, w2, b2):
    """Pure-JAX reference (NHWC conv) mirroring the PyTorch forward."""
    x = jnp.transpose(x_nchw, (0, 2, 3, 1))
    dn = ("NHWC", "HWIO", "NHWC")
    y = lax.conv_general_dilated(x, w1, (1, 1), ((1, 1), (1, 1)),
                                 dimension_numbers=dn) + b1
    y = jnp.where(y > 0, y, 0.2 * y)
    y = lax.conv_general_dilated(y, w2, (1, 1), ((1, 1), (1, 1)),
                                 dimension_numbers=dn) + b2
    out = y + x
    return jnp.transpose(out, (0, 3, 1, 2))


if __name__ == "__main__":
    # Small shapes consistent with the module (inchannel == outchannel for the residual).
    N, C, H, W = 2, 4, 16, 16
    inchannel = outchannel = C

    key = jax.random.PRNGKey(0)
    kx, k1, k2 = jax.random.split(key, 3)

    # Deterministic init matching __init__: weight ~ N(0, sqrt(2 / (k*k*out))), bias = 0.
    std = math.sqrt(2.0 / (3 * 3 * outchannel))
    w1 = jax.random.normal(k1, (3, 3, inchannel, outchannel), jnp.float32) * std
    b1 = jnp.zeros((outchannel,), jnp.float32)
    w2 = jax.random.normal(k2, (3, 3, outchannel, outchannel), jnp.float32) * std
    b2 = jnp.zeros((outchannel,), jnp.float32)

    x = jax.random.normal(kx, (N, C, H, W), jnp.float32)

    out = jax.block_until_ready(jax.jit(resblock_sr)(x, w1, b1, w2, b2))
    ref = jax.block_until_ready(_reference(x, w1, b1, w2, b2))

    assert out.shape == (N, outchannel, H, W)
    assert jnp.allclose(out, ref, atol=1e-4, rtol=1e-4), "mismatch vs reference"

    print("KERNEL_OK")
</pallas_src>

<mosaic_0001>
module attributes {stable_mosaic.version = 11 : i64} {
  func.func @_resblock_kernel(%arg0: i32, %arg1: memref<1x8x504xf32, #tpu.memory_space<vmem>>, %arg2: memref<8x72xf32, #tpu.memory_space<vmem>>, %arg3: memref<8x1xf32, #tpu.memory_space<vmem>>, %arg4: memref<4x72xf32, #tpu.memory_space<vmem>>, %arg5: memref<4x1xf32, #tpu.memory_space<vmem>>, %arg6: memref<1x434xf32, #tpu.memory_space<vmem>>, %arg7: memref<1x4x384xf32, #tpu.memory_space<vmem>>) attributes {dimension_semantics = [#tpu.dimension_semantics<parallel>], iteration_bounds = array<i64: 2>, scalar_prefetch = 0 : i64, scratch_operands = 0 : i64, tpu.core_type = #tpu.core_type<tc>, window_params = [{transform_indices = @transform_0, window_bounds = array<i64: 1, 8, 504>}, {pipeline_mode = #tpu.pipeline_mode<synchronous>, transform_indices = @transform_1, window_bounds = array<i64: 8, 72>}, {pipeline_mode = #tpu.pipeline_mode<synchronous>, transform_indices = @transform_2, window_bounds = array<i64: 8, 1>}, {pipeline_mode = #tpu.pipeline_mode<synchronous>, transform_indices = @transform_3, window_bounds = array<i64: 4, 72>}, {pipeline_mode = #tpu.pipeline_mode<synchronous>, transform_indices = @transform_4, window_bounds = array<i64: 4, 1>}, {pipeline_mode = #tpu.pipeline_mode<synchronous>, transform_indices = @transform_5, window_bounds = array<i64: 1, 434>}, {transform_indices = @transform_6, window_bounds = array<i64: 1, 4, 384>}]} {
    %c0 = arith.constant 0 : index
    %c0_0 = arith.constant 0 : index
    %c0_1 = arith.constant 0 : index
    %0 = vector.load %arg1[%c0, %c0_0, %c0_1] : memref<1x8x504xf32, #tpu.memory_space<vmem>>, vector<1x8x504xf32>
    %1 = vector.shape_cast %0 : vector<1x8x504xf32> to vector<8x504xf32>
    %c0_2 = arith.constant 0 : index
    %c0_3 = arith.constant 0 : index
    %2 = vector.load %arg6[%c0_2, %c0_3] : memref<1x434xf32, #tpu.memory_space<vmem>>, vector<1x434xf32>
    %3 = vector.extract_strided_slice %1 {offsets = [0, 0], sizes = [8, 434], strides = [1, 1]} : vector<8x504xf32> to vector<8x434xf32>
    %4 = vector.extract_strided_slice %1 {offsets = [0, 1], sizes = [8, 434], strides = [1, 1]} : vector<8x504xf32> to vector<8x434xf32>
    %5 = vector.extract_strided_slice %1 {offsets = [0, 2], sizes = [8, 434], strides = [1, 1]} : vector<8x504xf32> to vector<8x434xf32>
    %6 = vector.extract_strided_slice %1 {offsets = [0, 24], sizes = [8, 434], strides = [1, 1]} : vector<8x504xf32> to vector<8x434xf32>
    %7 = vector.extract_strided_slice %1 {offsets = [0, 25], sizes = [8, 434], strides = [1, 1]} : vector<8x504xf32> to vector<8x434xf32>
    %8 = vector.extract_strided_slice %1 {offsets = [0, 26], sizes = [8, 434], strides = [1, 1]} : vector<8x504xf32> to vector<8x434xf32>
    %9 = vector.extract_strided_slice %1 {offsets = [0, 48], sizes = [8, 434], strides = [1, 1]} : vector<8x504xf32> to vector<8x434xf32>
    %10 = vector.extract_strided_slice %1 {offsets = [0, 49], sizes = [8, 434], strides = [1, 1]} : vector<8x504xf32> to vector<8x434xf32>
    %11 = vector.extract_strided_slice %1 {offsets = [0, 50], sizes = [8, 434], strides = [1, 1]} : vector<8x504xf32> to vector<8x434xf32>
    %12 = tpu.concatenate %3, %4, %5, %6, %7, %8, %9, %10, %11 in 0 : vector<8x434xf32>, vector<8x434xf32>, vector<8x434xf32>, vector<8x434xf32>, vector<8x434xf32>, vector<8x434xf32>, vector<8x434xf32>, vector<8x434xf32>, vector<8x434xf32> -> vector<72x434xf32>
    %c0_4 = arith.constant 0 : index
    %c0_5 = arith.constant 0 : index
    %13 = vector.load %arg2[%c0_4, %c0_5] : memref<8x72xf32, #tpu.memory_space<vmem>>, vector<8x72xf32>
    %cst = arith.constant dense<0.000000e+00> : vector<8x434xf32>
    %14 = tpu.matmul %13, %12, %cst {dimension_numbers = #tpu.dot_dimension_numbers<[1], [0], [0], [1], [0, 0, 1, 1], [], []>} : vector<8x72xf32>, vector<72x434xf32>, vector<8x434xf32> -> vector<8x434xf32>
    %c0_6 = arith.constant 0 : index
    %c0_7 = arith.constant 0 : index
    %15 = vector.load %arg3[%c0_6, %c0_7] : memref<8x1xf32, #tpu.memory_space<vmem>>, vector<8x1xf32>
    %16 = vector.broadcast %15 : vector<8x1xf32> to vector<8x434xf32>
    %17 = arith.addf %14, %16 : vector<8x434xf32>
    %cst_8 = arith.constant 0.000000e+00 : f32
    %18 = vector.broadcast %cst_8 : f32 to vector<8x434xf32>
    %19 = arith.cmpf ogt, %17, %18 : vector<8x434xf32>
    %cst_9 = arith.constant 2.000000e-01 : f32
    %20 = vector.broadcast %cst_9 : f32 to vector<8x434xf32>
    %21 = arith.mulf %20, %17 : vector<8x434xf32>
    %22 = arith.select %19, %17, %21 : vector<8x434xi1>, vector<8x434xf32>
    %23 = vector.broadcast %2 : vector<1x434xf32> to vector<8x434xf32>
    %24 = arith.mulf %22, %23 : vector<8x434xf32>
    %25 = vector.extract_strided_slice %24 {offsets = [0, 0], sizes = [8, 384], strides = [1, 1]} : vector<8x434xf32> to vector<8x384xf32>
    %26 = vector.extract_strided_slice %24 {offsets = [0, 1], sizes = [8, 384], strides = [1, 1]} : vector<8x434xf32> to vector<8x384xf32>
    %27 = vector.extract_strided_slice %24 {offsets = [0, 2], sizes = [8, 384], strides = [1, 1]} : vector<8x434xf32> to vector<8x384xf32>
    %28 = vector.extract_strided_slice %24 {offsets = [0, 24], sizes = [8, 384], strides = [1, 1]} : vector<8x434xf32> to vector<8x384xf32>
    %29 = vector.extract_strided_slice %24 {offsets = [0, 25], sizes = [8, 384], strides = [1, 1]} : vector<8x434xf32> to vector<8x384xf32>
    %30 = vector.extract_strided_slice %24 {offsets = [0, 26], sizes = [8, 384], strides = [1, 1]} : vector<8x434xf32> to vector<8x384xf32>
    %31 = vector.extract_strided_slice %24 {offsets = [0, 48], sizes = [8, 384], strides = [1, 1]} : vector<8x434xf32> to vector<8x384xf32>
    %32 = vector.extract_strided_slice %24 {offsets = [0, 49], sizes = [8, 384], strides = [1, 1]} : vector<8x434xf32> to vector<8x384xf32>
    %33 = vector.extract_strided_slice %24 {offsets = [0, 50], sizes = [8, 384], strides = [1, 1]} : vector<8x434xf32> to vector<8x384xf32>
    %34 = tpu.concatenate %25, %26, %27, %28, %29, %30, %31, %32, %33 in 0 : vector<8x384xf32>, vector<8x384xf32>, vector<8x384xf32>, vector<8x384xf32>, vector<8x384xf32>, vector<8x384xf32>, vector<8x384xf32>, vector<8x384xf32>, vector<8x384xf32> -> vector<72x384xf32>
    %c0_10 = arith.constant 0 : index
    %c0_11 = arith.constant 0 : index
    %35 = vector.load %arg4[%c0_10, %c0_11] : memref<4x72xf32, #tpu.memory_space<vmem>>, vector<4x72xf32>
    %cst_12 = arith.constant dense<0.000000e+00> : vector<4x384xf32>
    %36 = tpu.matmul %35, %34, %cst_12 {dimension_numbers = #tpu.dot_dimension_numbers<[1], [0], [0], [1], [0, 0, 1, 1], [], []>} : vector<4x72xf32>, vector<72x384xf32>, vector<4x384xf32> -> vector<4x384xf32>
    %c0_13 = arith.constant 0 : index
    %c0_14 = arith.constant 0 : index
    %37 = vector.load %arg5[%c0_13, %c0_14] : memref<4x1xf32, #tpu.memory_space<vmem>>, vector<4x1xf32>
    %38 = vector.broadcast %37 : vector<4x1xf32> to vector<4x384xf32>
    %39 = arith.addf %36, %38 : vector<4x384xf32>
    %40 = vector.extract_strided_slice %1 {offsets = [0, 50], sizes = [4, 384], strides = [1, 1]} : vector<8x504xf32> to vector<4x384xf32>
    %41 = arith.addf %39, %40 : vector<4x384xf32>
    %c0_15 = arith.constant 0 : index
    %c0_16 = arith.constant 0 : index
    %c0_17 = arith.constant 0 : index
    %42 = vector.load %arg7[%c0_15, %c0_16, %c0_17] : memref<1x4x384xf32, #tpu.memory_space<vmem>>, vector<1x4x384xf32>
    %43 = vector.shape_cast %42 : vector<1x4x384xf32> to vector<4x384xf32>
    %44 = vector.shape_cast %41 : vector<4x384xf32> to vector<1x4x384xf32>
    tpu.vector_store %arg7[%c0_15, %c0_16, %c0_17], %44 {strides = array<i32>} : memref<1x4x384xf32, #tpu.memory_space<vmem>>, vector<1x4x384xf32>,
    return
  }
  func.func @transform_0(%arg0: i32) -> (i32, i32, i32) {
    %c0_i32 = arith.constant 0 : i32
    %c0_i32_0 = arith.constant 0 : i32
    %c0_i32_1 = arith.constant 0 : i32
    return %arg0, %c0_i32, %c0_i32_0 : i32, i32, i32
  }
  func.func @transform_1(%arg0: i32) -> (i32, i32) {
    %c0_i32 = arith.constant 0 : i32
    %c0_i32_0 = arith.constant 0 : i32
    %c0_i32_1 = arith.constant 0 : i32
    return %c0_i32, %c0_i32_0 : i32, i32
  }
  func.func @transform_2(%arg0: i32) -> (i32, i32) {
    %c0_i32 = arith.constant 0 : i32
    %c0_i32_0 = arith.constant 0 : i32
    %c0_i32_1 = arith.constant 0 : i32
    return %c0_i32, %c0_i32_0 : i32, i32
  }
  func.func @transform_3(%arg0: i32) -> (i32, i32) {
    %c0_i32 = arith.constant 0 : i32
    %c0_i32_0 = arith.constant 0 : i32
    %c0_i32_1 = arith.constant 0 : i32
    return %c0_i32, %c0_i32_0 : i32, i32
  }
  func.func @transform_4(%arg0: i32) -> (i32, i32) {
    %c0_i32 = arith.constant 0 : i32
    %c0_i32_0 = arith.constant 0 : i32
    %c0_i32_1 = arith.constant 0 : i32
    return %c0_i32, %c0_i32_0 : i32, i32
  }
  func.func @transform_5(%arg0: i32) -> (i32, i32) {
    %c0_i32 = arith.constant 0 : i32
    %c0_i32_0 = arith.constant 0 : i32
    %c0_i32_1 = arith.constant 0 : i32
    return %c0_i32, %c0_i32_0 : i32, i32
  }
  func.func @transform_6(%arg0: i32) -> (i32, i32, i32) {
    %c0_i32 = arith.constant 0 : i32
    %c0_i32_0 = arith.constant 0 : i32
    %c0_i32_1 = arith.constant 0 : i32
    return %arg0, %c0_i32, %c0_i32_0 : i32, i32, i32
  }
}

</mosaic_0001>

<llo_original>
// kernel: resblock_sr.1
$region0: #{resblock_sr.1}
  #allocation0 [shape = 'u32[]', space=smem, size = 0x4, offset = 0x4, fixed_abs, tag = 'smem constant byte address 0x4 - core index']
  #allocation1 [shape = 'u32[144,128]{1,0:T(1,128)}', space=vmem, size = 0x12000, scoped, tag = 'internal scratch']
  %s0 = inlined_call_operand.vmem [shape: f32[2,8,504], index: 0, kind: input, shape index: {}]
  %s1 = inlined_call_operand.vmem [shape: f32[8,72], index: 1, kind: input, shape index: {}]
  %s2 = inlined_call_operand.vmem [shape: f32[8,1], index: 2, kind: input, shape index: {}]
  %s3 = inlined_call_operand.vmem [shape: f32[4,72], index: 3, kind: input, shape index: {}]
  %s4 = inlined_call_operand.vmem [shape: f32[4,1], index: 4, kind: input, shape index: {}]
  %s5 = inlined_call_operand.vmem [shape: f32[1,434], index: 5, kind: input, shape index: {}]
  %s6 = inlined_call_operand.vmem [shape: f32[2,4,384], index: 6, kind: output, shape index: {}]
  %s7 = sld [smem:[#allocation0]]
  $region57: #{resblock_sr.1} parent=0
    _
  %s9 = ssub.s32 1, %s7
  %s10 = scalar_select 0, %s9, %s7
  loop: start=0, step=1, limit=4
  $region2: #{resblock_sr.1} parent=0 // loop_pre_header
    _
  $region3: #{resblock_sr.1} parent=0 // loop_header
    %s12 = sphi 0, %s16
    %p13 = scmp.ge.s32.totalorder %s12, 4
    %s22 = sphi 0, %s24
    %s25 = sphi 0, %s22
    %s26 = sphi 0, %s25
    %s42 = sphi 0, %s26
    %s46 = sphi 0, %s46
    %s48 = sphi 0, %s46
    %s49 = sphi 0, %s48
    %s63 = sphi 0, %s49
    %s67 = sphi 0, %s67
    %s69 = sphi 0, %s67
    %s70 = sphi 0, %s69
    %s84 = sphi 0, %s70
    %s88 = sphi 0, %s88
    %s90 = sphi 0, %s88
    %s91 = sphi 0, %s90
    %s105 = sphi 0, %s91
    %s109 = sphi 0, %s109
    %s111 = sphi 0, %s109
    %s112 = sphi 0, %s111
    %s126 = sphi 0, %s112
    %s130 = sphi 0, %s130
    %s132 = sphi 0, %s130
    %s133 = sphi 0, %s132
    %s147 = sphi 0, %s133
    %s153 = sphi 0, %s155
    %s156 = sphi 0, %s153
    %s157 = sphi 0, %s156
    %s173 = sphi 0, %s157
  $region4: #{resblock_sr.1} parent=0 // loop_header_branch
    %15 = sbr.rel (%p13) target = $region8
  $region5: #{resblock_sr.1} parent=0 // loop_body
    %s17 = ssub.s32 %s12, 1
    %s18 = ssub.s32 %s12, 2
    %s19 = sadd.s32 %s12, 1
    %s20 = ssub.s32 %s12, %s19
    %p21 = scmp.eq.s32.totalorder %s20, 0
    %s23 = sadd.s32 %s22, 1
    %s24 = scalar_select %p21, %s22, %s23
    %p27 = pneg %p21
    %p28 = scmp.eq.s32.totalorder %s12, 1
    %p29 = por %p27, %p28
    %p30 = scmp.ne.s32.totalorder %s22, %s25
    %p31 = scmp.eq.s32.totalorder %s12, 0
    %p32 = por %p30, %p31
    %p33 = scmp.ne.s32.totalorder %s22, %s25
    %p34 = scmp.eq.s32.totalorder %s17, 1
    %p35 = por %p33, %p34
    %p36 = scmp.ne.s32.totalorder %s25, %s26
    %p37 = scmp.eq.s32.totalorder %s17, 0
    %p38 = por %p36, %p37
    %p39 = scmp.ne.s32.totalorder %s25, %s26
    %p40 = scmp.eq.s32.totalorder %s18, 1
    %p41 = por %p39, %p40
    %p43 = scmp.ne.s32.totalorder %s26, %s42
    %p44 = scmp.eq.s32.totalorder %s18, 0
    %p45 = por %p43, %p44
    %s47 = sadd.s32 %s46, 1
    %p50 = scmp.eq.s32.totalorder %s12, 1
    %p51 = scmp.ne.s32.totalorder %s46, %s48
    %p52 = scmp.eq.s32.totalorder %s12, 0
    %p53 = por %p51, %p52
    %p54 = scmp.ne.s32.totalorder %s46, %s48
    %p55 = scmp.eq.s32.totalorder %s17, 1
    %p56 = por %p54, %p55
    %p57 = scmp.ne.s32.totalorder %s48, %s49
    %p58 = scmp.eq.s32.totalorder %s17, 0
    %p59 = por %p57, %p58
    %p60 = scmp.ne.s32.totalorder %s48, %s49
    %p61 = scmp.eq.s32.totalorder %s18, 1
    %p62 = por %p60, %p61
    %p64 = scmp.ne.s32.totalorder %s49, %s63
    %p65 = scmp.eq.s32.totalorder %s18, 0
    %p66 = por %p64, %p65
    %s68 = sadd.s32 %s67, 1
    %p71 = scmp.eq.s32.totalorder %s12, 1
    %p72 = scmp.ne.s32.totalorder %s67, %s69
    %p73 = scmp.eq.s32.totalorder %s12, 0
    %p74 = por %p72, %p73
    %p75 = scmp.ne.s32.totalorder %s67, %s69
    %p76 = scmp.eq.s32.totalorder %s17, 1
    %p77 = por %p75, %p76
    %p78 = scmp.ne.s32.totalorder %s69, %s70
    %p79 = scmp.eq.s32.totalorder %s17, 0
    %p80 = por %p78, %p79
    %p81 = scmp.ne.s32.totalorder %s69, %s70
    %p82 = scmp.eq.s32.totalorder %s18, 1
    %p83 = por %p81, %p82
    %p85 = scmp.ne.s32.totalorder %s70, %s84
    %p86 = scmp.eq.s32.totalorder %s18, 0
    %p87 = por %p85, %p86
    %s89 = sadd.s32 %s88, 1
    %p92 = scmp.eq.s32.totalorder %s12, 1
    %p93 = scmp.ne.s32.totalorder %s88, %s90
    %p94 = scmp.eq.s32.totalorder %s12, 0
    %p95 = por %p93, %p94
    %p96 = scmp.ne.s32.totalorder %s88, %s90
    %p97 = scmp.eq.s32.totalorder %s17, 1
    %p98 = por %p96, %p97
    %p99 = scmp.ne.s32.totalorder %s90, %s91
    %p100 = scmp.eq.s32.totalorder %s17, 0
    %p101 = por %p99, %p100
    %p102 = scmp.ne.s32.totalorder %s90, %s91
    %p103 = scmp.eq.s32.totalorder %s18, 1
    %p104 = por %p102, %p103
    %p106 = scmp.ne.s32.totalorder %s91, %s105
    %p107 = scmp.eq.s32.totalorder %s18, 0
    %p108 = por %p106, %p107
    %s110 = sadd.s32 %s109, 1
    %p113 = scmp.eq.s32.totalorder %s12, 1
    %p114 = scmp.ne.s32.totalorder %s109, %s111
    %p115 = scmp.eq.s32.totalorder %s12, 0
    %p116 = por %p114, %p115
    %p117 = scmp.ne.s32.totalorder %s109, %s111
    %p118 = scmp.eq.s32.totalorder %s17, 1
    %p119 = por %p117, %p118
    %p120 = scmp.ne.s32.totalorder %s111, %s112
    %p121 = scmp.eq.s32.totalorder %s17, 0
    %p122 = por %p120, %p121
    %p123 = scmp.ne.s32.totalorder %s111, %s112
    %p124 = scmp.eq.s32.totalorder %s18, 1
    %p125 = por %p123, %p124
    %p127 = scmp.ne.s32.totalorder %s112, %s126
    %p128 = scmp.eq.s32.totalorder %s18, 0
    %p129 = por %p127, %p128
    %s131 = sadd.s32 %s130, 1
    %p134 = scmp.eq.s32.totalorder %s12, 1
    %p135 = scmp.ne.s32.totalorder %s130, %s132
    %p136 = scmp.eq.s32.totalorder %s12, 0
    %p137 = por %p135, %p136
    %p138 = scmp.ne.s32.totalorder %s130, %s132
    %p139 = scmp.eq.s32.totalorder %s17, 1
    %p140 = por %p138, %p139
    %p141 = scmp.ne.s32.totalorder %s132, %s133
    %p142 = scmp.eq.s32.totalorder %s17, 0
    %p143 = por %p141, %p142
    %p144 = scmp.ne.s32.totalorder %s132, %s133
    %p145 = scmp.eq.s32.totalorder %s18, 1
    %p146 = por %p144, %p145
    %p148 = scmp.ne.s32.totalorder %s133, %s147
    %p149 = scmp.eq.s32.totalorder %s18, 0
    %p150 = por %p148, %p149
    %s151 = ssub.s32 %s12, %s19
    %p152 = scmp.eq.s32.totalorder %s151, 0
    %s154 = sadd.s32 %s153, 1
    %s155 = scalar_select %p152, %s153, %s154
    %p158 = pneg %p152
    %p159 = scmp.eq.s32.totalorder %s12, 1
    %p160 = por %p158, %p159
    %p161 = scmp.ne.s32.totalorder %s153, %s156
    %p162 = scmp.eq.s32.totalorder %s12, 0
    %p163 = por %p161, %p162
    %p164 = scmp.ne.s32.totalorder %s153, %s156
    %p165 = scmp.eq.s32.totalorder %s17, 1
    %p166 = por %p164, %p165
    %p167 = scmp.ne.s32.totalorder %s156, %s157
    %p168 = scmp.eq.s32.totalorder %s17, 0
    %p169 = por %p167, %p168
    %p170 = scmp.ne.s32.totalorder %s156, %s157
    %p171 = scmp.eq.s32.totalorder %s18, 1
    %p172 = por %p170, %p171
    %p174 = scmp.ne.s32.totalorder %s157, %s173
    %p175 = scmp.eq.s32.totalorder %s18, 0
    %p176 = por %p174, %p175
    %p177 = scmp.le.s32.totalorder 1, %s12
    %p178 = scmp.lt.s32.totalorder %s12, 3
    %p179 = pnand %p177, %p178
    %p180 = pneg %p179
    // Predicated region
    $region9: #{resblock_sr.1} parent=5 // pred_check
      _
    $region10: #{resblock_sr.1} parent=5 // pred_check_branch
      %182 = sbr.rel (%p179) target = $region12
    $region11: #{resblock_sr.1} parent=5 // pred_region
      %s183 = ssub.s32 %s12, 1
      // Predicated region
      $region13: #{resblock_sr.1} parent=11 // pred_check
        %p184 = pneg %p59
      $region14: #{resblock_sr.1} parent=11 // pred_check_branch
        %186 = sbr.rel (%p184) target = $region16
      $region15: #{resblock_sr.1} parent=11 // pred_region
        _
      $region16: #{resblock_sr.1} parent=11 // pred_fallthru
        _
      // Predicated region
      $region17: #{resblock_sr.1} parent=11 // pred_check
        %p187 = pneg %p80
      $region18: #{resblock_sr.1} parent=11 // pred_check_branch
        %189 = sbr.rel (%p187) target = $region20
      $region19: #{resblock_sr.1} parent=11 // pred_region
        _
      $region20: #{resblock_sr.1} parent=11 // pred_fallthru
        _
      // Predicated region
      $region21: #{resblock_sr.1} parent=11 // pred_check
        %p190 = pneg %p101
      $region22: #{resblock_sr.1} parent=11 // pred_check_branch
        %192 = sbr.rel (%p190) target = $region24
      $region23: #{resblock_sr.1} parent=11 // pred_region
        _
      $region24: #{resblock_sr.1} parent=11 // pred_fallthru
        _
      // Predicated region
      $region25: #{resblock_sr.1} parent=11 // pred_check
        %p193 = pneg %p122
      $region26: #{resblock_sr.1} parent=11 // pred_check_branch
        %195 = sbr.rel (%p193) target = $region28
      $region27: #{resblock_sr.1} parent=11 // pred_region
        _
      $region28: #{resblock_sr.1} parent=11 // pred_fallthru
        _
      // Predicated region
      $region29: #{resblock_sr.1} parent=11 // pred_check
        %p196 = pneg %p143
      $region30: #{resblock_sr.1} parent=11 // pred_check_branch
        %198 = sbr.rel (%p196) target = $region32
      $region31: #{resblock_sr.1} parent=11 // pred_region
        _
      $region32: #{resblock_sr.1} parent=11 // pred_fallthru
        _
    $region12: #{resblock_sr.1} parent=5 // pred_fallthru
      _
    %p199 = scmp.lt.s32.totalorder %s12, 2
    // Predicated region
    $region33: #{resblock_sr.1} parent=5 // pred_check
      %p200 = pneg %p199
    $region34: #{resblock_sr.1} parent=5 // pred_check_branch
      %202 = sbr.rel (%p200) target = $region36
    $region35: #{resblock_sr.1} parent=5 // pred_region
      // Predicated region
      $region37: #{resblock_sr.1} parent=35 // pred_check
        %p203 = pneg %p32
      $region38: #{resblock_sr.1} parent=35 // pred_check_branch
        %205 = sbr.rel (%p203) target = $region40
      $region39: #{resblock_sr.1} parent=35 // pred_region
        %p206 = scmp.lt.s32.totalorder %s12, 1
        %s207 = scalar_select %p206, %s12, 1
        %s208 = smul.addr %s207, 4
        %s209 = smul.addr %s208, 8
        %s210 = scalar_lea.vmem %s0, %s209
      $region40: #{resblock_sr.1} parent=35 // pred_fallthru
        _
    $region36: #{resblock_sr.1} parent=5 // pred_fallthru
      _
    %p211 = scmp.le.s32.totalorder 1, %s12
    %p212 = scmp.lt.s32.totalorder %s12, 3
    %p213 = pnand %p211, %p212
    %p214 = pneg %p213
    // Predicated region
    $region41: #{resblock_sr.1} parent=5 // pred_check
      _
    $region42: #{resblock_sr.1} parent=5 // pred_check_branch
      %216 = sbr.rel (%p213) target = $region44
    $region43: #{resblock_sr.1} parent=5 // pred_region
      %s217 = ssub.s32 %s12, 1
      %p218 = scmp.lt.s32.totalorder %s17, 1
      %s219 = scalar_select %p218, %s17, 1
      %s220 = smul.addr %s219, 4
      %s221 = smul.addr %s220, 8
      %s222 = scalar_lea.vmem %s0, %s221
      %p223 = pneg %p38
      %p224 = pneg %p35
      %p225 = pneg %p59
      %p226 = pneg %p56
      %p227 = pneg %p80
      %p228 = pneg %p77
      %p229 = pneg %p101
      %p230 = pneg %p98
      %p231 = pneg %p122
      %p232 = pneg %p119
      %p233 = pneg %p143
      %p234 = pneg %p140
      %p235 = pneg %p169
      %p236 = pneg %p166
      %p237 = scmp.lt.s32.totalorder %s17, 1
      %s238 = scalar_select %p237, %s17, 1
      %s239 = smul.addr %s238, 3
      %s240 = smul.addr %s239, 4
      %s241 = scalar_lea.vmem %s6, %s240
      %p242 = scmp.lt.s32.totalorder %s17, 1
      %s243 = scalar_select %p242, %s17, 1
      %s244 = smul.addr %s243, 4
      %s245 = smul.addr %s244, 8
      %s246 = scalar_lea.vmem %s0, %s245
      %p247 = scmp.lt.s32.totalorder %s17, 1
      %s248 = scalar_select %p247, %s17, 1
      %s249 = smul.addr %s248, 3
      %s250 = smul.addr %s249, 4
      %s251 = scalar_lea.vmem %s6, %s250
      %v252 = vld [vmem:[%s246] sm:$0xff]
      %v253 = vld [vmem:[%s246 + $0x8] sm:$0xff]
      %v254 = vld [vmem:[%s246 + $0x10] sm:$0xff]
      %v255 = vld [vmem:[%s246 + $0x18] sm:$0xff]
      %v256 = vld [vmem:[%s5] sm:$0xf]
      %261 = vrot.lane.b32.xlu0 %v252, 127
      %v262 = vpop.permute.xlu0 %261
      %263 = vrot.lane.b32.xlu0 %v253, 127
      %v264 = vpop.permute.xlu0 %263
      %265 = vrot.lane.b32.xlu0 %v254, 127
      %v266 = vpop.permute.xlu0 %265
      %267 = vrot.lane.b32.xlu0 %v255, 127
      %v268 = vpop.permute.xlu0 %267
      %vm269 = vcmask 1039360
      %v270 = vsel %vm269, %v262, %v264
      %v271 = vsel %vm269, %v264, %v266
      %v272 = vsel %vm269, %v266, %v268
      %277 = vrot.lane.b32.xlu0 %v252, 126
      %v278 = vpop.permute.xlu0 %277
      %279 = vrot.lane.b32.xlu0 %v253, 126
      %v280 = vpop.permute.xlu0 %279
      %281 = vrot.lane.b32.xlu0 %v254, 126
      %v282 = vpop.permute.xlu0 %281
      %283 = vrot.lane.b32.xlu0 %v255, 126
      %v284 = vpop.permute.xlu0 %283
      %vm285 = vcmask 1031168
      %v286 = vsel %vm285, %v278, %v280
      %v287 = vsel %vm285, %v280, %v282
      %v288 = vsel %vm285, %v282, %v284
      %293 = vrot.lane.b32.xlu0 %v252, 104
      %v294 = vpop.permute.xlu0 %293
      %295 = vrot.lane.b32.xlu0 %v253, 104
      %v296 = vpop.permute.xlu0 %295
      %297 = vrot.lane.b32.xlu0 %v254, 104
      %v298 = vpop.permute.xlu0 %297
      %299 = vrot.lane.b32.xlu0 %v255, 104
      %v300 = vpop.permute.xlu0 %299
      %vm301 = vcmask 850944
      %v302 = vsel %vm301, %v294, %v296
      %v303 = vsel %vm301, %v296, %v298
      %v304 = vsel %vm301, %v298, %v300
      %309 = vrot.lane.b32.xlu0 %v252, 103
      %v310 = vpop.permute.xlu0 %309
      %311 = vrot.lane.b32.xlu0 %v253, 103
      %v312 = vpop.permute.xlu0 %311
      %313 = vrot.lane.b32.xlu0 %v254, 103
      %v314 = vpop.permute.xlu0 %313
      %315 = vrot.lane.b32.xlu0 %v255, 103
      %v316 = vpop.permute.xlu0 %315
      %vm317 = vcmask 842752
      %v318 = vsel %vm317, %v310, %v312
      %v319 = vsel %vm317, %v312, %v314
      %v320 = vsel %vm317, %v314, %v316
      %325 = vrot.lane.b32.xlu0 %v252, 102
      %v326 = vpop.permute.xlu0 %325
      %327 = vrot.lane.b32.xlu0 %v253, 102
      %v328 = vpop.permute.xlu0 %327
      %329 = vrot.lane.b32.xlu0 %v254, 102
      %v330 = vpop.permute.xlu0 %329
      %331 = vrot.lane.b32.xlu0 %v255, 102
      %v332 = vpop.permute.xlu0 %331
      %vm333 = vcmask 834560
      %v334 = vsel %vm333, %v326, %v328
      %v335 = vsel %vm333, %v328, %v330
      %v336 = vsel %vm333, %v330, %v332
      %341 = vrot.lane.b32.xlu0 %v252, 80
      %v342 = vpop.permute.xlu0 %341
      %343 = vrot.lane.b32.xlu0 %v253, 80
      %v344 = vpop.permute.xlu0 %343
      %345 = vrot.lane.b32.xlu0 %v254, 80
      %v346 = vpop.permute.xlu0 %345
      %347 = vrot.lane.b32.xlu0 %v255, 80
      %v348 = vpop.permute.xlu0 %347
      %vm349 = vcmask 654336
      %v350 = vsel %vm349, %v342, %v344
      %v351 = vsel %vm349, %v344, %v346
      %v352 = vsel %vm349, %v346, %v348
      %357 = vrot.lane.b32.xlu0 %v252, 79
      %v358 = vpop.permute.xlu0 %357
      %359 = vrot.lane.b32.xlu0 %v253, 79
      %v360 = vpop.permute.xlu0 %359
      %361 = vrot.lane.b32.xlu0 %v254, 79
      %v362 = vpop.permute.xlu0 %361
      %363 = vrot.lane.b32.xlu0 %v255, 79
      %v364 = vpop.permute.xlu0 %363
      %vm365 = vcmask 646144
      %v366 = vsel %vm365, %v358, %v360
      %v367 = vsel %vm365, %v360, %v362
      %v368 = vsel %vm365, %v362, %v364
      %373 = vrot.lane.b32.xlu0 %v252, 78
      %v374 = vpop.permute.xlu0 %373
      %375 = vrot.lane.b32.xlu0 %v253, 78
      %v376 = vpop.permute.xlu0 %375
      %377 = vrot.lane.b32.xlu0 %v254, 78
      %v378 = vpop.permute.xlu0 %377
      %379 = vrot.lane.b32.xlu0 %v255, 78
      %v380 = vpop.permute.xlu0 %379
      %vm381 = vcmask 637952
      %v382 = vsel %vm381, %v374, %v376
      %v383 = vsel %vm381, %v376, %v378
      %v384 = vsel %vm381, %v378, %v380
      %v389 = vld [vmem:[%s1] sm:$0xff]
      %v390 = vld [vmem:[%s2] sm:$0xff]
      %392 = vset.pattern.permute.xlu0 0
      %393 = vperm.xlu0 %392, %v390
      %v394 = vpop.permute.xlu0 %393
      %vm396 = vcmask 588800
      %v398 = vsel %vm396, %v389, 0
      %400 = vmatprep.subr.mxu0 %v253
      %401 = vmatpush1.msra.mxu0 %v252
      %402 = vmatprep.subr.mxu0 %v271
      %403 = vmatpush1.msra.mxu0 %v270
      %404 = vmatprep.subr.mxu0 %v287
      %405 = vmatpush1.msra.mxu0 %v286
      %406 = vmatprep.subr.mxu0 %v303
      %407 = vmatpush1.msra.mxu0 %v302
      %408 = vmatprep.subr.mxu0 %v319
      %409 = vmatpush1.msra.mxu0 %v318
      %410 = vmatprep.subr.mxu0 %v335
      %411 = vmatpush1.msra.mxu0 %v334
      %412 = vmatprep.subr.mxu0 %v351
      %413 = vmatpush1.msra.mxu0 %v350
      %414 = vmatprep.subr.mxu0 %v367
      %415 = vmatpush1.msra.mxu0 %v366
      %416 = vmatprep.subr.mxu0 %v383
      %417 = vmatpush1.msra.mxu0 %v382
      %418 = vmatprep.subr.mxu0 0.0
      %419 = vmatpush1.msra.mxu0 0.0
      %420 = vmatprep.subr.mxu0 0.0
      %421 = vmatpush1.msra.mxu0 0.0
      %422 = vmatprep.subr.mxu0 0.0
      %423 = vmatpush1.msra.mxu0 0.0
      %424 = vmatprep.subr.mxu0 0.0
      %425 = vmatpush1.msra.mxu0 0.0
      %426 = vmatprep.subr.mxu0 0.0
      %427 = vmatpush1.msra.mxu0 0.0
      %428 = vmatprep.subr.mxu0 0.0
      %429 = vmatpush1.msra.mxu0 0.0
      %430 = vmatprep.subr.mxu0 0.0
      %431 = vmatpush1.msra.mxu0 0.0
      %432 = vmatprep.subr.mxu0 0.0
      %433 = vmatpush1.msra.mxu0 0.0
      %434 = vmatprep.subr.mxu0 0.0
      %435 = vmatpush1.msra.mxu0 0.0
      %436 = vmatprep.subr.mxu0 0.0
      %437 = vmatpush1.msra.mxu0 0.0
      %438 = vmatprep.subr.mxu0 0.0
      %439 = vmatpush1.msra.mxu0 0.0
      %440 = vmatprep.subr.mxu0 0.0
      %441 = vmatpush1.msra.mxu0 0.0
      %442 = vmatprep.subr.mxu0 0.0
      %443 = vmatpush1.msra.mxu0 0.0
      %444 = vmatprep.subr.mxu0 0.0
      %445 = vmatpush1.msra.mxu0 0.0
      %446 = vmatprep.subr.mxu0 0.0
      %447 = vmatpush1.msra.mxu0 0.0
      %448 = vmatprep.subr.mxu0 0.0
      %449 = vmatpush1.msra.mxu0 0.0
      %450 = vmatprep.subr.mxu0 0.0
      %451 = vmatpush1.msra.mxu0 0.0
      %452 = vmatprep.subr.mxu0 0.0
      %453 = vmatpush1.msra.mxu0 0.0
      %454 = vmatprep.subr.mxu0 0.0
      %455 = vmatpush1.msra.mxu0 0.0
      %456 = vmatprep.subr.mxu0 0.0
      %457 = vmatpush1.msra.mxu0 0.0
      %458 = vmatprep.subr.mxu0 0.0
      %459 = vmatpush1.msra.mxu0 0.0
      %460 = vmatprep.subr.mxu0 0.0
      %461 = vmatpush1.msra.mxu0 0.0
      %462 = vmatprep.subr.mxu0 0.0
      %463 = vmatpush1.msra.mxu0 0.0
      %464 = vmatprep.mubr.f32.mxu0 0.0
      %465 = vmatmul.mubr.f32.gmra.mrb[0].mxu0 %v398
      %v466 = vpop.f32.mrb[0].mxu0
      %v467 = vadd.f32 %v394, %v466
      %v468 = vpop.f32.mrb[0].mxu0
      %v469 = vadd.f32 %v394, %v468
      %470 = vdwg.mxu0
      %471 = vmatprep.subr.mxu0 %v255
      %472 = vmatpush1.msra.mxu0 %v254
      %473 = vmatprep.subr.mxu0 %v268
      %474 = vmatpush1.msra.mxu0 %v272
      %475 = vmatprep.subr.mxu0 %v284
      %476 = vmatpush1.msra.mxu0 %v288
      %477 = vmatprep.subr.mxu0 %v300
      %478 = vmatpush1.msra.mxu0 %v304
      %479 = vmatprep.subr.mxu0 %v316
      %480 = vmatpush1.msra.mxu0 %v320
      %481 = vmatprep.subr.mxu0 %v332
      %482 = vmatpush1.msra.mxu0 %v336
      %483 = vmatprep.subr.mxu0 %v348
      %484 = vmatpush1.msra.mxu0 %v352
      %485 = vmatprep.subr.mxu0 %v364
      %486 = vmatpush1.msra.mxu0 %v368
      %487 = vmatprep.subr.mxu0 %v380
      %488 = vmatpush1.msra.mxu0 %v384
      %489 = vmatprep.subr.mxu0 0.0
      %490 = vmatpush1.msra.mxu0 0.0
      %491 = vmatprep.subr.mxu0 0.0
      %492 = vmatpush1.msra.mxu0 0.0
      %493 = vmatprep.subr.mxu0 0.0
      %494 = vmatpush1.msra.mxu0 0.0
      %495 = vmatprep.subr.mxu0 0.0
      %496 = vmatpush1.msra.mxu0 0.0
      %497 = vmatprep.subr.mxu0 0.0
      %498 = vmatpush1.msra.mxu0 0.0
      %499 = vmatprep.subr.mxu0 0.0
      %500 = vmatpush1.msra.mxu0 0.0
      %501 = vmatprep.subr.mxu0 0.0
      %502 = vmatpush1.msra.mxu0 0.0
      %503 = vmatprep.subr.mxu0 0.0
      %504 = vmatpush1.msra.mxu0 0.0
      %505 = vmatprep.subr.mxu0 0.0
      %506 = vmatpush1.msra.mxu0 0.0
      %507 = vmatprep.subr.mxu0 0.0
      %508 = vmatpush1.msra.mxu0 0.0
      %509 = vmatprep.subr.mxu0 0.0
      %510 = vmatpush1.msra.mxu0 0.0
      %511 = vmatprep.subr.mxu0 0.0
      %512 = vmatpush1.msra.mxu0 0.0
      %513 = vmatprep.subr.mxu0 0.0
      %514 = vmatpush1.msra.mxu0 0.0
      %515 = vmatprep.subr.mxu0 0.0
      %516 = vmatpush1.msra.mxu0 0.0
      %517 = vmatprep.subr.mxu0 0.0
      %518 = vmatpush1.msra.mxu0 0.0
      %519 = vmatprep.subr.mxu0 0.0
      %520 = vmatpush1.msra.mxu0 0.0
      %521 = vmatprep.subr.mxu0 0.0
      %522 = vmatpush1.msra.mxu0 0.0
      %523 = vmatprep.subr.mxu0 0.0
      %524 = vmatpush1.msra.mxu0 0.0
      %525 = vmatprep.subr.mxu0 0.0
      %526 = vmatpush1.msra.mxu0 0.0
      %527 = vmatprep.subr.mxu0 0.0
      %528 = vmatpush1.msra.mxu0 0.0
      %529 = vmatprep.subr.mxu0 0.0
      %530 = vmatpush1.msra.mxu0 0.0
      %531 = vmatprep.subr.mxu0 0.0
      %532 = vmatpush1.msra.mxu0 0.0
      %533 = vmatprep.subr.mxu0 0.0
      %534 = vmatpush1.msra.mxu0 0.0
      %535 = vmatprep.mubr.f32.mxu0 0.0
      %536 = vmatmul.mubr.f32.gmra.mrb[0].mxu0 %v398
      %v537 = vpop.f32.mrb[0].mxu0
      %v538 = vadd.f32 %v394, %v537
      %v539 = vpop.f32.mrb[0].mxu0
      %v540 = vadd.f32 %v394, %v539
      %541 = vdwg.mxu0
      %vm542 = vcmp.gt.f32.partialorder %v467, 0.0
      %vm543 = vcmp.gt.f32.partialorder %v469, 0.0
      %vm544 = vcmp.gt.f32.partialorder %v538, 0.0
      %vm545 = vcmp.gt.f32.partialorder %v540, 0.0
      %v546 = vmul.f32 %v467, 0.2
      %v547 = vmul.f32 %v469, 0.2
      %v548 = vmul.f32 %v538, 0.2
      %v549 = vmul.f32 %v540, 0.2
      %v550 = vsel %vm542, %v467, %v546
      %v551 = vsel %vm543, %v469, %v547
      %v552 = vsel %vm544, %v538, %v548
      %v553 = vsel %vm545, %v540, %v549
      %v555 = vlaneseq
      %v556 = vshrl.u32 %v555, 7
      %v557 = vsub.s32 0, %v556
      %v558 = vrot.slane %v256, %v557
      %v559 = vlaneseq
      %v560 = vshrl.u32 %v559, 7
      %v561 = vsub.s32 1, %v560
      %v562 = vrot.slane %v256, %v561
      %v563 = vlaneseq
      %v564 = vshrl.u32 %v563, 7
      %v565 = vsub.s32 2, %v564
      %v566 = vrot.slane %v256, %v565
      %v567 = vlaneseq
      %v568 = vshrl.u32 %v567, 7
      %v569 = vsub.s32 3, %v568
      %v570 = vrot.slane %v256, %v569
      %v575 = vmul.f32 %v550, %v558
      %v576 = vmul.f32 %v551, %v562
      %v577 = vmul.f32 %v552, %v566
      %v578 = vmul.f32 %v553, %v570
      %583 = vrot.lane.b32.xlu0 %v575, 127
      %v584 = vpop.permute.xlu0 %583
      %585 = vrot.lane.b32.xlu0 %v576, 127
      %v586 = vpop.permute.xlu0 %585
      %587 = vrot.lane.b32.xlu0 %v577, 127
      %v588 = vpop.permute.xlu0 %587
      %589 = vrot.lane.b32.xlu0 %v578, 127
      %v590 = vpop.permute.xlu0 %589
      %v591 = vsel %vm269, %v584, %v586
      %v592 = vsel %vm269, %v586, %v588
      %v593 = vsel %vm269, %v588, %v590
      %597 = vrot.lane.b32.xlu0 %v575, 126
      %v598 = vpop.permute.xlu0 %597
      %599 = vrot.lane.b32.xlu0 %v576, 126
      %v600 = vpop.permute.xlu0 %599
      %601 = vrot.lane.b32.xlu0 %v577, 126
      %v602 = vpop.permute.xlu0 %601
      %603 = vrot.lane.b32.xlu0 %v578, 126
      %v604 = vpop.permute.xlu0 %603
      %v605 = vsel %vm285, %v598, %v600
      %v606 = vsel %vm285, %v600, %v602
      %v607 = vsel %vm285, %v602, %v604
      %611 = vrot.lane.b32.xlu0 %v575, 104
      %v612 = vpop.permute.xlu0 %611
      %613 = vrot.lane.b32.xlu0 %v576, 104
      %v614 = vpop.permute.xlu0 %613
      %615 = vrot.lane.b32.xlu0 %v577, 104
      %v616 = vpop.permute.xlu0 %615
      %617 = vrot.lane.b32.xlu0 %v578, 104
      %v618 = vpop.permute.xlu0 %617
      %v619 = vsel %vm301, %v612, %v614
      %v620 = vsel %vm301, %v614, %v616
      %v621 = vsel %vm301, %v616, %v618
      %625 = vrot.lane.b32.xlu0 %v575, 103
      %v626 = vpop.permute.xlu0 %625
      %627 = vrot.lane.b32.xlu0 %v576, 103
      %v628 = vpop.permute.xlu0 %627
      %629 = vrot.lane.b32.xlu0 %v577, 103
      %v630 = vpop.permute.xlu0 %629
      %631 = vrot.lane.b32.xlu0 %v578, 103
      %v632 = vpop.permute.xlu0 %631
      %v633 = vsel %vm317, %v626, %v628
      %v634 = vsel %vm317, %v628, %v630
      %v635 = vsel %vm317, %v630, %v632
      %639 = vrot.lane.b32.xlu0 %v575, 102
      %v640 = vpop.permute.xlu0 %639
      %641 = vrot.lane.b32.xlu0 %v576, 102
      %v642 = vpop.permute.xlu0 %641
      %643 = vrot.lane.b32.xlu0 %v577, 102
      %v644 = vpop.permute.xlu0 %643
      %645 = vrot.lane.b32.xlu0 %v578, 102
      %v646 = vpop.permute.xlu0 %645
      %v647 = vsel %vm333, %v640, %v642
      %v648 = vsel %vm333, %v642, %v644
      %v649 = vsel %vm333, %v644, %v646
      %653 = vrot.lane.b32.xlu0 %v575, 80
      %v654 = vpop.permute.xlu0 %653
      %655 = vrot.lane.b32.xlu0 %v576, 80
      %v656 = vpop.permute.xlu0 %655
      %657 = vrot.lane.b32.xlu0 %v577, 80
      %v658 = vpop.permute.xlu0 %657
      %659 = vrot.lane.b32.xlu0 %v578, 80
      %v660 = vpop.permute.xlu0 %659
      %v661 = vsel %vm349, %v654, %v656
      %v662 = vsel %vm349, %v656, %v658
      %v663 = vsel %vm349, %v658, %v660
      %667 = vrot.lane.b32.xlu0 %v575, 79
      %v668 = vpop.permute.xlu0 %667
      %669 = vrot.lane.b32.xlu0 %v576, 79
      %v670 = vpop.permute.xlu0 %669
      %671 = vrot.lane.b32.xlu0 %v577, 79
      %v672 = vpop.permute.xlu0 %671
      %673 = vrot.lane.b32.xlu0 %v578, 79
      %v674 = vpop.permute.xlu0 %673
      %v675 = vsel %vm365, %v668, %v670
      %v676 = vsel %vm365, %v670, %v672
      %v677 = vsel %vm365, %v672, %v674
      %681 = vrot.lane.b32.xlu0 %v575, 78
      %v682 = vpop.permute.xlu0 %681
      %683 = vrot.lane.b32.xlu0 %v576, 78
      %v684 = vpop.permute.xlu0 %683
      %685 = vrot.lane.b32.xlu0 %v577, 78
      %v686 = vpop.permute.xlu0 %685
      %687 = vrot.lane.b32.xlu0 %v578, 78
      %v688 = vpop.permute.xlu0 %687
      %v689 = vsel %vm381, %v682, %v684
      %v690 = vsel %vm381, %v684, %v686
      %v691 = vsel %vm381, %v686, %v688
      %v695 = vld [vmem:[%s3] sm:$0xf]
      %v696 = vld [vmem:[%s4] sm:$0xf]
      %698 = vset.pattern.permute.xlu0 0
      %699 = vperm.xlu0 %698, %v696
      %v700 = vpop.permute.xlu0 %699
      %v703 = vsel %vm396, %v695, 0
      %705 = vmatprep.subr.mxu0 %v576
      %706 = vmatpush1.msra.mxu0 %v575
      %707 = vmatprep.subr.mxu0 %v592
      %708 = vmatpush1.msra.mxu0 %v591
      %709 = vmatprep.subr.mxu0 %v606
      %710 = vmatpush1.msra.mxu0 %v605
      %711 = vmatprep.subr.mxu0 %v620
      %712 = vmatpush1.msra.mxu0 %v619
      %713 = vmatprep.subr.mxu0 %v634
      %714 = vmatpush1.msra.mxu0 %v633
      %715 = vmatprep.subr.mxu0 %v648
      %716 = vmatpush1.msra.mxu0 %v647
      %717 = vmatprep.subr.mxu0 %v662
      %718 = vmatpush1.msra.mxu0 %v661
      %719 = vmatprep.subr.mxu0 %v676
      %720 = vmatpush1.msra.mxu0 %v675
      %721 = vmatprep.subr.mxu0 %v690
      %722 = vmatpush1.msra.mxu0 %v689
      %723 = vmatprep.subr.mxu0 0.0
      %724 = vmatpush1.msra.mxu0 0.0
      %725 = vmatprep.subr.mxu0 0.0
      %726 = vmatpush1.msra.mxu0 0.0
      %727 = vmatprep.subr.mxu0 0.0
      %728 = vmatpush1.msra.mxu0 0.0
      %729 = vmatprep.subr.mxu0 0.0
      %730 = vmatpush1.msra.mxu0 0.0
      %731 = vmatprep.subr.mxu0 0.0
      %732 = vmatpush1.msra.mxu0 0.0
      %733 = vmatprep.subr.mxu0 0.0
      %734 = vmatpush1.msra.mxu0 0.0
      %735 = vmatprep.subr.mxu0 0.0
      %736 = vmatpush1.msra.mxu0 0.0
      %737 = vmatprep.subr.mxu0 0.0
      %738 = vmatpush1.msra.mxu0 0.0
      %739 = vmatprep.subr.mxu0 0.0
      %740 = vmatpush1.msra.mxu0 0.0
      %741 = vmatprep.subr.mxu0 0.0
      %742 = vmatpush1.msra.mxu0 0.0
      %743 = vmatprep.subr.mxu0 0.0
      %744 = vmatpush1.msra.mxu0 0.0
      %745 = vmatprep.subr.mxu0 0.0
      %746 = vmatpush1.msra.mxu0 0.0
      %747 = vmatprep.subr.mxu0 0.0
      %748 = vmatpush1.msra.mxu0 0.0
      %749 = vmatprep.subr.mxu0 0.0
      %750 = vmatpush1.msra.mxu0 0.0
      %751 = vmatprep.subr.mxu0 0.0
      %752 = vmatpush1.msra.mxu0 0.0
      %753 = vmatprep.subr.mxu0 0.0
      %754 = vmatpush1.msra.mxu0 0.0
      %755 = vmatprep.subr.mxu0 0.0
      %756 = vmatpush1.msra.mxu0 0.0
      %757 = vmatprep.subr.mxu0 0.0
      %758 = vmatpush1.msra.mxu0 0.0
      %759 = vmatprep.subr.mxu0 0.0
      %760 = vmatpush1.msra.mxu0 0.0
      %761 = vmatprep.subr.mxu0 0.0
      %762 = vmatpush1.msra.mxu0 0.0
      %763 = vmatprep.subr.mxu0 0.0
      %764 = vmatpush1.msra.mxu0 0.0
      %765 = vmatprep.subr.mxu0 0.0
      %766 = vmatpush1.msra.mxu0 0.0
      %767 = vmatprep.subr.mxu0 0.0
      %768 = vmatpush1.msra.mxu0 0.0
      %769 = vmatprep.mubr.f32.mxu0 0.0
      %770 = vmatmul.mubr.f32.gmra.mrb[0].mxu0 %v703
      %v771 = vpop.f32.mrb[0].mxu0
      %v772 = vadd.f32 %v700, %v771
      %v773 = vpop.f32.mrb[0].mxu0
      %v774 = vadd.f32 %v700, %v773
      %775 = vdwg.mxu0
      %776 = vmatprep.subr.mxu0 0.0
      %777 = vmatpush1.msra.mxu0 %v577
      %778 = vmatprep.subr.mxu0 0.0
      %779 = vmatpush1.msra.mxu0 %v593
      %780 = vmatprep.subr.mxu0 0.0
      %781 = vmatpush1.msra.mxu0 %v607
      %782 = vmatprep.subr.mxu0 0.0
      %783 = vmatpush1.msra.mxu0 %v621
      %784 = vmatprep.subr.mxu0 0.0
      %785 = vmatpush1.msra.mxu0 %v635
      %786 = vmatprep.subr.mxu0 0.0
      %787 = vmatpush1.msra.mxu0 %v649
      %788 = vmatprep.subr.mxu0 0.0
      %789 = vmatpush1.msra.mxu0 %v663
      %790 = vmatprep.subr.mxu0 0.0
      %791 = vmatpush1.msra.mxu0 %v677
      %792 = vmatprep.subr.mxu0 0.0
      %793 = vmatpush1.msra.mxu0 %v691
      %794 = vmatprep.subr.mxu0 0.0
      %795 = vmatpush1.msra.mxu0 0.0
      %796 = vmatprep.subr.mxu0 0.0
      %797 = vmatpush1.msra.mxu0 0.0
      %798 = vmatprep.subr.mxu0 0.0
      %799 = vmatpush1.msra.mxu0 0.0
      %800 = vmatprep.subr.mxu0 0.0
      %801 = vmatpush1.msra.mxu0 0.0
      %802 = vmatprep.subr.mxu0 0.0
      %803 = vmatpush1.msra.mxu0 0.0
      %804 = vmatprep.subr.mxu0 0.0
      %805 = vmatpush1.msra.mxu0 0.0
      %806 = vmatprep.subr.mxu0 0.0
      %807 = vmatpush1.msra.mxu0 0.0
      %808 = vmatprep.subr.mxu0 0.0
      %809 = vmatpush1.msra.mxu0 0.0
      %810 = vmatprep.subr.mxu0 0.0
      %811 = vmatpush1.msra.mxu0 0.0
      %812 = vmatprep.subr.mxu0 0.0
      %813 = vmatpush1.msra.mxu0 0.0
      %814 = vmatprep.subr.mxu0 0.0
      %815 = vmatpush1.msra.mxu0 0.0
      %816 = vmatprep.subr.mxu0 0.0
      %817 = vmatpush1.msra.mxu0 0.0
      %818 = vmatprep.subr.mxu0 0.0
      %819 = vmatpush1.msra.mxu0 0.0
      %820 = vmatprep.subr.mxu0 0.0
      %821 = vmatpush1.msra.mxu0 0.0
      %822 = vmatprep.subr.mxu0 0.0
      %823 = vmatpush1.msra.mxu0 0.0
      %824 = vmatprep.subr.mxu0 0.0
      %825 = vmatpush1.msra.mxu0 0.0
      %826 = vmatprep.subr.mxu0 0.0
      %827 = vmatpush1.msra.mxu0 0.0
      %828 = vmatprep.subr.mxu0 0.0
      %829 = vmatpush1.msra.mxu0 0.0
      %830 = vmatprep.subr.mxu0 0.0
      %831 = vmatpush1.msra.mxu0 0.0
      %832 = vmatprep.subr.mxu0 0.0
      %833 = vmatpush1.msra.mxu0 0.0
      %834 = vmatprep.subr.mxu0 0.0
      %835 = vmatpush1.msra.mxu0 0.0
      %836 = vmatprep.subr.mxu0 0.0
      %837 = vmatpush1.msra.mxu0 0.0
      %838 = vmatprep.subr.mxu0 0.0
      %839 = vmatpush1.msra.mxu0 0.0
      %840 = vmatprep.mubr.f32.mxu0 0.0
      %841 = vmatmul.mubr.f32.gmra.mrb[0].mxu0 %v703
      %v842 = vpop.f32.mrb[0].mxu0
      %v843 = vadd.f32 %v700, %v842
      %v844 = vpop.f32.mrb[0].mxu0
      %845 = vdwg.mxu0
      %v846 = vadd.f32 %v772, %v382
      %v847 = vadd.f32 %v774, %v383
      %v848 = vadd.f32 %v843, %v384
      %v851 = vcombine.low %v846, %v847
      %853 = vst [vmem:[%s251] sm:$0xff] %v851
      %854 = vst [vmem:[%s251 + $0x8] sm:$0xf] %v848
      %p855 = scmp.lt.s32.totalorder %s17, 1
      %s856 = scalar_select %p855, %s17, 1
      %s857 = smul.addr %s856, 3
      %s858 = smul.addr %s857, 4
      %s859 = scalar_lea.vmem %s6, %s858
      // Predicated region
      $region45: #{resblock_sr.1} parent=43 // pred_check
        %p860 = pneg %p166
      $region46: #{resblock_sr.1} parent=43 // pred_check_branch
        %862 = sbr.rel (%p860) target = $region48
      $region47: #{resblock_sr.1} parent=43 // pred_region
        _
      $region48: #{resblock_sr.1} parent=43 // pred_fallthru
        _
    $region44: #{resblock_sr.1} parent=5 // pred_fallthru
      _
    %p863 = scmp.le.s32.totalorder 2, %s12
    // Predicated region
    $region49: #{resblock_sr.1} parent=5 // pred_check
      %p864 = pneg %p863
    $region50: #{resblock_sr.1} parent=5 // pred_check_branch
      %866 = sbr.rel (%p864) target = $region52
    $region51: #{resblock_sr.1} parent=5 // pred_region
      %s867 = ssub.s32 %s12, 2
      // Predicated region
      $region53: #{resblock_sr.1} parent=51 // pred_check
        %p868 = pneg %p172
      $region54: #{resblock_sr.1} parent=51 // pred_check_branch
        %870 = sbr.rel (%p868) target = $region56
      $region55: #{resblock_sr.1} parent=51 // pred_region
        %p871 = scmp.lt.s32.totalorder %s18, 1
        %s872 = scalar_select %p871, %s18, 1
        %s873 = smul.addr %s872, 3
        %s874 = smul.addr %s873, 4
        %s875 = scalar_lea.vmem %s6, %s874
      $region56: #{resblock_sr.1} parent=51 // pred_fallthru
        _
    $region52: #{resblock_sr.1} parent=5 // pred_fallthru
      _
  $region6: #{resblock_sr.1} parent=0 // loop_footer
    %s16 = sadd.s32 1, %s12
  $region7: #{resblock_sr.1} parent=0 // loop_footer_branch
    %11 = sbr.rel target = $region3
  $region8: #{resblock_sr.1} parent=0 // loop_exit
    _

</llo_original>
